<compile_context>
chip_gen: v6e
topology: v6e:2x2x1
jax: 0.10.0
libtpu: 0.0.40
codegen_flags: <defaults>
</compile_context>

<pallas_src>
import functools

import jax
import jax.numpy as jnp
from jax.experimental import pallas as pl
from jax.experimental.pallas import tpu as pltpu

_LANE = 128


def _round_up(x, m):
    return ((x + m - 1) // m) * m


# ----------------------------------------------------------------------------
# Fused kernel: x @ W1 + b1 -> ReLU -> @ W2 + b2 -> logits | softmax | entropy
# Output layout per row (128 lanes): [0,C)=logits, [C,2C)=proba, 2C=entropy.
# W2/b2 are prepared so lanes [C,2C) carry a duplicate copy of the logits,
# which the masked softmax consumes in place (no lane permutation needed).
# ----------------------------------------------------------------------------
def _fused_forward_kernel(x_ref, w1_ref, b1_ref, w2_ref, b2_ref, out_ref, *,
                          n_classes):
    # bf16 x bf16 -> f32 on the MXU; bias add + ReLU on the VPU in f32.
    h = jnp.dot(x_ref[...], w1_ref[...], preferred_element_type=jnp.float32)
    h = jnp.maximum(h + b1_ref[...], 0.0)
    logits = jnp.dot(h.astype(w2_ref.dtype), w2_ref[...],
                     preferred_element_type=jnp.float32) + b2_ref[...]

    lane = jax.lax.broadcasted_iota(jnp.int32, logits.shape, dimension=1)
    is_logit = lane < n_classes                       # lanes [0, C)
    is_proba = (lane >= n_classes) & (lane < 2 * n_classes)  # lanes [C, 2C)
    is_ent = lane == 2 * n_classes                    # lane 2C

    # Softmax over the duplicated-logit lanes only; everything else -> -1e30.
    masked = jnp.where(is_proba, logits, jnp.float32(-1e30))
    m = jnp.max(masked, axis=-1, keepdims=True)
    e = jnp.exp(masked - m)                           # non-proba lanes -> 0
    denom = jnp.sum(e, axis=-1, keepdims=True)
    p = e / denom                                     # exact divide (HBM-bound)

    # Entropy (torch: clamp(1e-8, 1-1e-8), -sum p log p) over real lanes only.
    pc = jnp.clip(p, 1e-8, 1.0 - 1e-8)
    ent = -jnp.sum(jnp.where(is_proba, pc * jnp.log(pc), 0.0),
                   axis=-1, keepdims=True)

    # Lane-dense packed store: logits | proba | entropy | zeros.
    out_ref[...] = jnp.where(is_logit, logits, jnp.where(is_ent, ent, p))


# ----------------------------------------------------------------------------
# One-time (model-load) parameter preparation: pad, duplicate class columns,
# cast matmul operands to bf16.  Hoisted out of the per-call hot path.
# ----------------------------------------------------------------------------
def prepare_params(w1, b1, w2, b2, *, matmul_dtype=jnp.bfloat16):
    in_features, hidden = w1.shape
    n_classes = w2.shape[1]
    assert 2 * n_classes + 1 <= _LANE, "packed output needs 2C+1 <= 128 lanes"

    hp = _round_up(hidden, _LANE)
    cp = _LANE
    b1 = jnp.asarray(b1).reshape(1, -1)
    b2 = jnp.asarray(b2).reshape(1, -1)

    w1p = jnp.zeros((in_features, hp), jnp.float32).at[:, :hidden].set(w1)
    b1p = jnp.zeros((1, hp), jnp.float32).at[:, :hidden].set(b1)
    # Logits in lanes [0,C) plus a duplicate copy in [C,2C) for the softmax path.
    w2p = (jnp.zeros((hp, cp), jnp.float32)
           .at[:hidden, :n_classes].set(w2)
           .at[:hidden, n_classes:2 * n_classes].set(w2))
    b2p = (jnp.zeros((1, cp), jnp.float32)
           .at[:, :n_classes].set(b2)
           .at[:, n_classes:2 * n_classes].set(b2))

    return (w1p.astype(matmul_dtype), b1p, w2p.astype(matmul_dtype), b2p)


# ----------------------------------------------------------------------------
# Per-call forward: batch grid over row tiles, weights VMEM-resident.
# Returns (logits, proba, entropy) with shapes (B, C), (B, C), (B,).
# ----------------------------------------------------------------------------
def nn_forward_fused(x, w1p, b1p, w2p, b2p, *, n_classes, block_rows=1024):
    batch, in_features = x.shape
    hp = w1p.shape[1]
    cp = w2p.shape[1]

    x = x.astype(w1p.dtype)           # no-op if the producer already emits bf16

    # Row tile: big (fewer grid steps) but 8-row aligned; pad batch only if the
    # tile does not divide it (demo batch=8 needs no padding / no row slice).
    tb = min(block_rows, _round_up(batch, 8))
    bp = _round_up(batch, tb)
    if bp != batch:
        x = jnp.zeros((bp, in_features), x.dtype).at[:batch].set(x)

    kernel = functools.partial(_fused_forward_kernel, n_classes=n_classes)

    packed = pl.pallas_call(
        kernel,
        out_shape=jax.ShapeDtypeStruct((bp, cp), jnp.float32),
        grid_spec=pltpu.PrefetchScalarGridSpec(
            num_scalar_prefetch=0,
            grid=(pl.cdiv(bp, tb),),
            in_specs=[
                pl.BlockSpec((tb, in_features), lambda i: (i, 0)),  # x tile
                pl.BlockSpec((in_features, hp), lambda i: (0, 0)),  # W1 resident
                pl.BlockSpec((1, hp), lambda i: (0, 0)),            # b1 resident
                pl.BlockSpec((hp, cp), lambda i: (0, 0)),           # W2 resident
                pl.BlockSpec((1, cp), lambda i: (0, 0)),            # b2 resident
            ],
            out_specs=pl.BlockSpec((tb, cp), lambda i: (i, 0)),     # packed out
        ),
        compiler_params=pltpu.CompilerParams(
            dimension_semantics=("parallel",),   # batch tiles independent
            vmem_limit_bytes=32 * 1024 * 1024,   # ample headroom at tb=1024
        ),
    )(x, w1p, b1p, w2p, b2p)

    logits = packed[:batch, :n_classes]
    proba = packed[:batch, n_classes:2 * n_classes]
    entropy = packed[:batch, 2 * n_classes]
    return logits, proba, entropy


# ----------------------------------------------------------------------------
# Deterministic parameter init (synthetic; no checkpoint loading)
# ----------------------------------------------------------------------------
def init_params(key, in_features, hidden, n_classes):
    k1, k2, k3, k4 = jax.random.split(key, 4)
    # Mimic torch.nn.Linear default: U(-1/sqrt(fan_in), 1/sqrt(fan_in)).
    lim1 = 1.0 / (in_features ** 0.5)
    lim2 = 1.0 / (hidden ** 0.5)
    w1 = jax.random.uniform(k1, (in_features, hidden), jnp.float32, -lim1, lim1)
    b1 = jax.random.uniform(k2, (1, hidden), jnp.float32, -lim1, lim1)
    w2 = jax.random.uniform(k3, (hidden, n_classes), jnp.float32, -lim2, lim2)
    b2 = jax.random.uniform(k4, (1, n_classes), jnp.float32, -lim2, lim2)
    return w1, b1, w2, b2


# TODO(synk): training (fit/validation), dataloader-driven score(), and the
# sklearn-style calibration/AUROC metrics are host-side orchestration with no
# Pallas equivalent; only the forward / predict_proba / predict_entropy hot
# path is implemented as a kernel.

if __name__ == "__main__":
    batch, in_features, hidden, n_classes = 8, 32, 64, 10

    key = jax.random.PRNGKey(0)
    kx, kp = jax.random.split(key)
    x = jax.random.normal(kx, (batch, in_features), jnp.float32)
    w1, b1, w2, b2 = init_params(kp, in_features, hidden, n_classes)

    # One-time model-load prep (padding, class-column duplication, bf16 cast).
    w1p, b1p, w2p, b2p = prepare_params(w1, b1, w2, b2)

    # Fused NNWrapper.forward / predict_proba / predict_entropy.
    logits, proba, entropy = nn_forward_fused(
        x, w1p, b1p, w2p, b2p, n_classes=n_classes)
    jax.block_until_ready((logits, proba, entropy))

    # Pure-JAX reference (same bf16 matmul inputs, f32 accumulate).
    xb = x.astype(jnp.bfloat16)
    h_ref = jnp.maximum(
        jnp.dot(xb, w1.astype(jnp.bfloat16),
                preferred_element_type=jnp.float32) + b1, 0.0)
    logits_ref = jnp.dot(h_ref.astype(jnp.bfloat16), w2.astype(jnp.bfloat16),
                         preferred_element_type=jnp.float32) + b2
    proba_ref = jax.nn.softmax(logits_ref, axis=-1)
    pc = jnp.clip(proba_ref, 1e-8, 1.0 - 1e-8)
    ent_ref = -jnp.sum(pc * jnp.log(pc), axis=-1)

    assert logits.shape == (batch, n_classes)
    assert proba.shape == (batch, n_classes)
    assert entropy.shape == (batch,)
    assert jnp.allclose(logits, logits_ref, atol=2e-3, rtol=1e-3), "logits mismatch"
    assert jnp.allclose(proba, proba_ref, atol=1e-3), "proba mismatch"
    assert jnp.allclose(entropy, ent_ref, atol=2e-3), "entropy mismatch"

    print("KERNEL_OK")
</pallas_src>

<mosaic_0001>
module attributes {stable_mosaic.version = 11 : i64} {
  func.func @_fused_forward_kernel(%arg0: i32, %arg1: memref<8x32xbf16, #tpu.memory_space<vmem>>, %arg2: memref<32x128xbf16, #tpu.memory_space<vmem>>, %arg3: memref<1x128xf32, #tpu.memory_space<vmem>>, %arg4: memref<128x128xbf16, #tpu.memory_space<vmem>>, %arg5: memref<1x128xf32, #tpu.memory_space<vmem>>, %arg6: memref<8x128xf32, #tpu.memory_space<vmem>>) attributes {dimension_semantics = [#tpu.dimension_semantics<parallel>], iteration_bounds = array<i64: 1>, scalar_prefetch = 0 : i64, scratch_operands = 0 : i64, tpu.core_type = #tpu.core_type<tc>, window_params = [{transform_indices = @transform_0, window_bounds = array<i64: 8, 32>}, {pipeline_mode = #tpu.pipeline_mode<synchronous>, transform_indices = @transform_1, window_bounds = array<i64: 32, 128>}, {pipeline_mode = #tpu.pipeline_mode<synchronous>, transform_indices = @transform_2, window_bounds = array<i64: 1, 128>}, {pipeline_mode = #tpu.pipeline_mode<synchronous>, transform_indices = @transform_3, window_bounds = array<i64: 128, 128>}, {pipeline_mode = #tpu.pipeline_mode<synchronous>, transform_indices = @transform_4, window_bounds = array<i64: 1, 128>}, {transform_indices = @transform_5, window_bounds = array<i64: 8, 128>}]} {
    %c0 = arith.constant 0 : index
    %c0_0 = arith.constant 0 : index
    %0 = vector.load %arg1[%c0, %c0_0] : memref<8x32xbf16, #tpu.memory_space<vmem>>, vector<8x32xbf16>
    %c0_1 = arith.constant 0 : index
    %c0_2 = arith.constant 0 : index
    %1 = vector.load %arg2[%c0_1, %c0_2] : memref<32x128xbf16, #tpu.memory_space<vmem>>, vector<32x128xbf16>
    %cst = arith.constant dense<0.000000e+00> : vector<8x128xf32>
    %2 = tpu.matmul %0, %1, %cst {dimension_numbers = #tpu.dot_dimension_numbers<[1], [0], [0], [1], [0, 0, 1, 1], [], []>} : vector<8x32xbf16>, vector<32x128xbf16>, vector<8x128xf32> -> vector<8x128xf32>
    %c0_3 = arith.constant 0 : index
    %c0_4 = arith.constant 0 : index
    %3 = vector.load %arg3[%c0_3, %c0_4] : memref<1x128xf32, #tpu.memory_space<vmem>>, vector<1x128xf32>
    %4 = vector.broadcast %3 : vector<1x128xf32> to vector<8x128xf32>
    %5 = arith.addf %2, %4 : vector<8x128xf32>
    %cst_5 = arith.constant 0.000000e+00 : f32
    %6 = vector.broadcast %cst_5 : f32 to vector<8x128xf32>
    %7 = arith.maximumf %5, %6 : vector<8x128xf32>
    %8 = arith.truncf %7 : vector<8x128xf32> to vector<8x128xbf16>
    %c0_6 = arith.constant 0 : index
    %c0_7 = arith.constant 0 : index
    %9 = vector.load %arg4[%c0_6, %c0_7] : memref<128x128xbf16, #tpu.memory_space<vmem>>, vector<128x128xbf16>
    %cst_8 = arith.constant dense<0.000000e+00> : vector<8x128xf32>
    %10 = tpu.matmul %8, %9, %cst_8 {dimension_numbers = #tpu.dot_dimension_numbers<[1], [0], [0], [1], [0, 0, 1, 1], [], []>} : vector<8x128xbf16>, vector<128x128xbf16>, vector<8x128xf32> -> vector<8x128xf32>
    %c0_9 = arith.constant 0 : index
    %c0_10 = arith.constant 0 : index
    %11 = vector.load %arg5[%c0_9, %c0_10] : memref<1x128xf32, #tpu.memory_space<vmem>>, vector<1x128xf32>
    %12 = vector.broadcast %11 : vector<1x128xf32> to vector<8x128xf32>
    %13 = arith.addf %10, %12 : vector<8x128xf32>
    %14 = tpu.iota {dimensions = array<i32: 1>} : vector<8x128xi32>
    %c10_i32 = arith.constant 10 : i32
    %15 = vector.broadcast %c10_i32 : i32 to vector<8x128xi32>
    %16 = arith.cmpi slt, %14, %15 : vector<8x128xi32>
    %c10_i32_11 = arith.constant 10 : i32
    %17 = vector.broadcast %c10_i32_11 : i32 to vector<8x128xi32>
    %18 = arith.cmpi sge, %14, %17 : vector<8x128xi32>
    %c20_i32 = arith.constant 20 : i32
    %19 = vector.broadcast %c20_i32 : i32 to vector<8x128xi32>
    %20 = arith.cmpi slt, %14, %19 : vector<8x128xi32>
    %21 = arith.andi %18, %20 : vector<8x128xi1>
    %c20_i32_12 = arith.constant 20 : i32
    %22 = vector.broadcast %c20_i32_12 : i32 to vector<8x128xi32>
    %23 = arith.cmpi eq, %14, %22 : vector<8x128xi32>
    %cst_13 = arith.constant -1.000000e+30 : f32
    %24 = vector.broadcast %cst_13 : f32 to vector<8x128xf32>
    %25 = arith.select %21, %13, %24 : vector<8x128xi1>, vector<8x128xf32>
    %cst_14 = arith.constant dense<0xFF800000> : vector<8xf32>
    %26 = vector.multi_reduction <maximumf>, %25, %cst_14 [1] : vector<8x128xf32> to vector<8xf32>
    %27 = vector.shape_cast %26 : vector<8xf32> to vector<8x1xf32>
    %28 = vector.broadcast %27 : vector<8x1xf32> to vector<8x128xf32>
    %29 = arith.subf %25, %28 : vector<8x128xf32>
    %30 = math.exp %29 : vector<8x128xf32>
    %cst_15 = arith.constant dense<0.000000e+00> : vector<8xf32>
    %31 = vector.multi_reduction <add>, %30, %cst_15 [1] : vector<8x128xf32> to vector<8xf32>
    %32 = vector.shape_cast %31 : vector<8xf32> to vector<8x1xf32>
    %33 = vector.broadcast %32 : vector<8x1xf32> to vector<8x128xf32>
    %34 = arith.divf %30, %33 : vector<8x128xf32>
    %cst_16 = arith.constant 9.99999993E-9 : f32
    %cst_17 = arith.constant 1.000000e+00 : f32
    %35 = vector.broadcast %cst_16 : f32 to vector<8x128xf32>
    %36 = arith.maximumf %35, %34 : vector<8x128xf32>
    %37 = vector.broadcast %cst_17 : f32 to vector<8x128xf32>
    %38 = arith.minimumf %37, %36 : vector<8x128xf32>
    %39 = math.log %38 : vector<8x128xf32>
    %40 = arith.mulf %38, %39 : vector<8x128xf32>
    %cst_18 = arith.constant 0.000000e+00 : f32
    %41 = vector.broadcast %cst_18 : f32 to vector<8x128xf32>
    %42 = arith.select %21, %40, %41 : vector<8x128xi1>, vector<8x128xf32>
    %cst_19 = arith.constant dense<0.000000e+00> : vector<8xf32>
    %43 = vector.multi_reduction <add>, %42, %cst_19 [1] : vector<8x128xf32> to vector<8xf32>
    %44 = vector.shape_cast %43 : vector<8xf32> to vector<8x1xf32>
    %cst_20 = arith.constant 0.000000e+00 : f32
    %45 = vector.broadcast %cst_20 : f32 to vector<8x1xf32>
    %46 = arith.subf %45, %44 : vector<8x1xf32>
    %47 = vector.shape_cast %46 : vector<8x1xf32> to vector<8x1xf32>
    %48 = vector.broadcast %47 : vector<8x1xf32> to vector<8x128xf32>
    %49 = arith.select %23, %48, %34 : vector<8x128xi1>, vector<8x128xf32>
    %50 = arith.select %16, %13, %49 : vector<8x128xi1>, vector<8x128xf32>
    %c0_21 = arith.constant 0 : index
    %c0_22 = arith.constant 0 : index
    %51 = vector.load %arg6[%c0_21, %c0_22] : memref<8x128xf32, #tpu.memory_space<vmem>>, vector<8x128xf32>
    tpu.vector_store %arg6[%c0_21, %c0_22], %50 {strides = array<i32>} : memref<8x128xf32, #tpu.memory_space<vmem>>, vector<8x128xf32>,
    return
  }
  func.func @transform_0(%arg0: i32) -> (i32, i32) {
    %c0_i32 = arith.constant 0 : i32
    %c0_i32_0 = arith.constant 0 : i32
    return %arg0, %c0_i32 : i32, i32
  }
  func.func @transform_1(%arg0: i32) -> (i32, i32) {
    %c0_i32 = arith.constant 0 : i32
    %c0_i32_0 = arith.constant 0 : i32
    %c0_i32_1 = arith.constant 0 : i32
    return %c0_i32, %c0_i32_0 : i32, i32
  }
  func.func @transform_2(%arg0: i32) -> (i32, i32) {
    %c0_i32 = arith.constant 0 : i32
    %c0_i32_0 = arith.constant 0 : i32
    %c0_i32_1 = arith.constant 0 : i32
    return %c0_i32, %c0_i32_0 : i32, i32
  }
  func.func @transform_3(%arg0: i32) -> (i32, i32) {
    %c0_i32 = arith.constant 0 : i32
    %c0_i32_0 = arith.constant 0 : i32
    %c0_i32_1 = arith.constant 0 : i32
    return %c0_i32, %c0_i32_0 : i32, i32
  }
  func.func @transform_4(%arg0: i32) -> (i32, i32) {
    %c0_i32 = arith.constant 0 : i32
    %c0_i32_0 = arith.constant 0 : i32
    %c0_i32_1 = arith.constant 0 : i32
    return %c0_i32, %c0_i32_0 : i32, i32
  }
  func.func @transform_5(%arg0: i32) -> (i32, i32) {
    %c0_i32 = arith.constant 0 : i32
    %c0_i32_0 = arith.constant 0 : i32
    return %arg0, %c0_i32 : i32, i32
  }
}

</mosaic_0001>

<llo_original>
// kernel: tpu_custom_call.1
$region0: #{tpu_custom_call.1}
  #allocation0 [shape = 'u32[]', space=smem, size = 0x4, offset = 0x4, fixed_abs, tag = 'smem constant byte address 0x4 - core index']
  #allocation1 [shape = 'u32[144,128]{1,0:T(1,128)}', space=vmem, size = 0x12000, scoped, tag = 'internal scratch']
  %s0 = inlined_call_operand.hbm [shape: bf16[8,32], index: 0, kind: input, shape index: {}]
  %s1 = inlined_call_operand.hbm [shape: bf16[32,128], index: 1, kind: input, shape index: {}]
  %s2 = inlined_call_operand.vmem [shape: f32[1,128], index: 2, kind: input, shape index: {}]
  %s3 = inlined_call_operand.hbm [shape: bf16[128,128], index: 3, kind: input, shape index: {}]
  %s4 = inlined_call_operand.vmem [shape: f32[1,128], index: 4, kind: input, shape index: {}]
  %s5 = inlined_call_operand.hbm [shape: f32[8,128], index: 5, kind: output, shape index: {}]
  %s6 = sld [smem:[#allocation0]]
  $region42: #{tpu_custom_call.1} parent=0
    _
  %s8 = ssub.s32 1, %s6
  %s9 = scalar_select 0, %s8, %s6
  $region1: #{tpu_custom_call.1} parent=0
    #allocation2 [shape = 'u8[2048]{0}', space=vmem, size = 0x800, scoped, tag = 'input window, operand 0, single buffered']
    #allocation3 [shape = 's32[1]{0}', space=sflag, size = 0x4, scoped, tag = 'scoped memory for tpu_custom_call.1']
    #allocation4 [shape = 's32[1]{0}', space=sflag, size = 0x4, scoped, tag = 'scoped memory for tpu_custom_call.1']
    #allocation5 [shape = 'u8[8192]{0}', space=vmem, size = 0x2000, scoped, tag = 'input window, operand 1, single buffered']
    #allocation6 [shape = 's32[1]{0}', space=sflag, size = 0x4, scoped, tag = 'scoped memory for tpu_custom_call.1']
    #allocation7 [shape = 'u8[32768]{0}', space=vmem, size = 0x8000, scoped, tag = 'input window, operand 3, single buffered']
    #allocation8 [shape = 'u8[4096]{0}', space=vmem, size = 0x1000, scoped, tag = 'output window, operand 0, single buffered']
    %10 = vsyncpa [#allocation3], 0
    %11 = vsyncpa [#allocation6], 0
    %12 = vsyncpa [#allocation4], 0
    // Predicated region
    $region2: #{tpu_custom_call.1} parent=1 // pred_check
      _
    $region3: #{tpu_custom_call.1} parent=1 // pred_check_branch
      %14 = sbr.rel (0) target = $region5
    $region4: #{tpu_custom_call.1} parent=1 // pred_region
      %s16 = ssub.s32 64, 64
      %17 = vsyncadd [#allocation3], %s16
      %s19 = sshll.u32 [#allocation2], 4
      %s20 = int_to_ptr.vmem [resolvable:$true] %s19
      %22 = dma.hbm_to_vmem [thread:$0]  %s0, 64, %s20, [#allocation3]
    $region5: #{tpu_custom_call.1} parent=1 // pred_fallthru
      _
    // Predicated region
    $region6: #{tpu_custom_call.1} parent=1 // pred_check
      _
    $region7: #{tpu_custom_call.1} parent=1 // pred_check_branch
      %24 = sbr.rel (0) target = $region9
    $region8: #{tpu_custom_call.1} parent=1 // pred_region
      %s26 = ssub.s32 256, 256
      %27 = vsyncadd [#allocation6], %s26
      %s28 = sshll.u32 [#allocation5], 4
      %s29 = int_to_ptr.vmem [resolvable:$true] %s28
      %34 = dma.hbm_to_vmem [thread:$0]  %s1, 256, %s29, [#allocation6], 64, 64, 4
    $region9: #{tpu_custom_call.1} parent=1 // pred_fallthru
      _
    // Predicated region
    $region10: #{tpu_custom_call.1} parent=1 // pred_check
      _
    $region11: #{tpu_custom_call.1} parent=1 // pred_check_branch
      %36 = sbr.rel (0) target = $region13
    $region12: #{tpu_custom_call.1} parent=1 // pred_region
      _
    $region13: #{tpu_custom_call.1} parent=1 // pred_fallthru
      _
    // Predicated region
    $region14: #{tpu_custom_call.1} parent=1 // pred_check
      _
    $region15: #{tpu_custom_call.1} parent=1 // pred_check_branch
      %38 = sbr.rel (0) target = $region17
    $region16: #{tpu_custom_call.1} parent=1 // pred_region
      %s40 = ssub.s32 1024, 1024
      %41 = vsyncadd [#allocation6], %s40
      %s42 = sshll.u32 [#allocation7], 4
      %s43 = int_to_ptr.vmem [resolvable:$true] %s42
      %48 = dma.hbm_to_vmem [thread:$0]  %s3, 1024, %s43, [#allocation6], 64, 64, 4
    $region17: #{tpu_custom_call.1} parent=1 // pred_fallthru
      _
    // Predicated region
    $region18: #{tpu_custom_call.1} parent=1 // pred_check
      _
    $region19: #{tpu_custom_call.1} parent=1 // pred_check_branch
      %50 = sbr.rel (0) target = $region21
    $region20: #{tpu_custom_call.1} parent=1 // pred_region
      _
    $region21: #{tpu_custom_call.1} parent=1 // pred_fallthru
      _
    // Predicated region
    $region22: #{tpu_custom_call.1} parent=1 // pred_check
      _
    $region23: #{tpu_custom_call.1} parent=1 // pred_check_branch
      %52 = sbr.rel (0) target = $region25
    $region24: #{tpu_custom_call.1} parent=1 // pred_region
      %53 = dma.done [#allocation3], 64
    $region25: #{tpu_custom_call.1} parent=1 // pred_fallthru
      _
    // Predicated region
    $region26: #{tpu_custom_call.1} parent=1 // pred_check
      _
    $region27: #{tpu_custom_call.1} parent=1 // pred_check_branch
      %55 = sbr.rel (0) target = $region29
    $region28: #{tpu_custom_call.1} parent=1 // pred_region
      %56 = dma.done [#allocation6], 256
    $region29: #{tpu_custom_call.1} parent=1 // pred_fallthru
      _
    // Predicated region
    $region30: #{tpu_custom_call.1} parent=1 // pred_check
      _
    $region31: #{tpu_custom_call.1} parent=1 // pred_check_branch
      %58 = sbr.rel (0) target = $region33
    $region32: #{tpu_custom_call.1} parent=1 // pred_region
      %59 = dma.done [#allocation6], 1024
    $region33: #{tpu_custom_call.1} parent=1 // pred_fallthru
      _
    %v61 = vld [vmem:[#allocation2] sm:$0xf]
    %v62 = vld [vmem:[#allocation5] sm:$0xf]
    %v63 = vld [vmem:[#allocation5 + $0x4] sm:$0xf]
    %v64 = vld [vmem:[#allocation5 + $0x8] sm:$0xf]
    %v65 = vld [vmem:[#allocation5 + $0xc] sm:$0xf]
    %v66 = vld [vmem:[%s2] sm:$0x1]
    %v68 = vlaneseq
    %v69 = vshrl.u32 %v68, 7
    %v70 = vsub.s32 0, %v69
    %v71 = vrot.slane %v66, %v70
    %v77 = vunpack.c.l.b16 %v62
    %v78 = vunpack.c.l.b16 %v63
    %v79 = vunpack.c.l.b16 %v64
    %v80 = vunpack.c.l.b16 %v65
    %v81 = vpack.c.b16 %v78, %v77
    %v82 = vpack.c.b16 %v80, %v79
    %vm85 = vcmask 261120
    %v87 = vsel %vm85, %v61, 0
    %89 = vmatprep.subr.bf16.mxu0 0
    %90 = vmatpush1.bf16.msra.mxu0 0
    %91 = vmatprep.subr.bf16.mxu0 0
    %92 = vmatpush1.bf16.msra.mxu0 0
    %93 = vmatprep.subr.bf16.mxu0 0
    %94 = vmatpush1.bf16.msra.mxu0 0
    %95 = vmatprep.subr.bf16.mxu0 0
    %96 = vmatpush1.bf16.msra.mxu0 0
    %97 = vmatprep.subr.bf16.mxu0 0
    %98 = vmatpush1.bf16.msra.mxu0 0
    %99 = vmatprep.subr.bf16.mxu0 0
    %100 = vmatpush1.bf16.msra.mxu0 0
    %101 = vmatprep.subr.bf16.mxu0 0
    %102 = vmatpush1.bf16.msra.mxu0 %v82
    %103 = vmatprep.subr.bf16.mxu0 0
    %104 = vmatpush1.bf16.msra.mxu0 %v81
    %105 = vmatprep.subr.bf16.mxu0 0
    %106 = vmatpush2.bf16.msra.mxu0 0
    %107 = vmatprep.subr.bf16.mxu0 0
    %108 = vmatpush2.bf16.msra.mxu0 0
    %109 = vmatprep.subr.bf16.mxu0 0
    %110 = vmatpush2.bf16.msra.mxu0 0
    %111 = vmatprep.subr.bf16.mxu0 0
    %112 = vmatpush2.bf16.msra.mxu0 0
    %113 = vmatprep.subr.bf16.mxu0 0
    %114 = vmatpush2.bf16.msra.mxu0 0
    %115 = vmatprep.subr.bf16.mxu0 0
    %116 = vmatpush2.bf16.msra.mxu0 0
    %117 = vmatprep.subr.bf16.mxu0 0
    %118 = vmatpush2.bf16.msra.mxu0 0
    %119 = vmatprep.subr.bf16.mxu0 0
    %120 = vmatpush2.bf16.msra.mxu0 0
    %121 = vmatprep.mubr.bf16.mxu0 0
    %122 = vmatmul.mubr.bf16.gmra.mxu0 %v87
    %v123 = vpop.f32.mrf.mxu0
    %v124 = vadd.f32 %v71, %v123
    %v125 = vpop.f32.mrf.mxu0
    %v126 = vpop.f32.mrf.mxu0
    %v127 = vpop.f32.mrf.mxu0
    %128 = vdwg.mxu0
    %v129 = vmax.f32 %v124, 0.0
    %v130 = vpack.c.bf16 %v129, %v129
    %v131 = vld [vmem:[#allocation7] sm:$0xf]
    %v132 = vld [vmem:[#allocation7 + $0x4] sm:$0xf]
    %v133 = vld [vmem:[#allocation7 + $0x8] sm:$0xf]
    %v134 = vld [vmem:[#allocation7 + $0xc] sm:$0xf]
    %v135 = vld [vmem:[#allocation7 + $0x10] sm:$0xf]
    %v136 = vld [vmem:[#allocation7 + $0x14] sm:$0xf]
    %v137 = vld [vmem:[#allocation7 + $0x18] sm:$0xf]
    %v138 = vld [vmem:[#allocation7 + $0x1c] sm:$0xf]
    %v139 = vld [vmem:[#allocation7 + $0x20] sm:$0xf]
    %v140 = vld [vmem:[#allocation7 + $0x24] sm:$0xf]
    %v141 = vld [vmem:[#allocation7 + $0x28] sm:$0xf]
    %v142 = vld [vmem:[#allocation7 + $0x2c] sm:$0xf]
    %v143 = vld [vmem:[#allocation7 + $0x30] sm:$0xf]
    %v144 = vld [vmem:[#allocation7 + $0x34] sm:$0xf]
    %v145 = vld [vmem:[#allocation7 + $0x38] sm:$0xf]
    %v146 = vld [vmem:[#allocation7 + $0x3c] sm:$0xf]
    %v147 = vld [vmem:[%s4] sm:$0x1]
    %v149 = vlaneseq
    %v150 = vshrl.u32 %v149, 7
    %v151 = vsub.s32 0, %v150
    %v152 = vrot.slane %v147, %v151
    %v170 = vunpack.c.l.b16 %v131
    %v171 = vunpack.c.l.b16 %v132
    %v172 = vunpack.c.l.b16 %v133
    %v173 = vunpack.c.l.b16 %v134
    %v174 = vunpack.c.l.b16 %v135
    %v175 = vunpack.c.l.b16 %v136
    %v176 = vunpack.c.l.b16 %v137
    %v177 = vunpack.c.l.b16 %v138
    %v178 = vunpack.c.l.b16 %v139
    %v179 = vunpack.c.l.b16 %v140
    %v180 = vunpack.c.l.b16 %v141
    %v181 = vunpack.c.l.b16 %v142
    %v182 = vunpack.c.l.b16 %v143
    %v183 = vunpack.c.l.b16 %v144
    %v184 = vunpack.c.l.b16 %v145
    %v185 = vunpack.c.l.b16 %v146
    %v186 = vpack.c.b16 %v171, %v170
    %v187 = vpack.c.b16 %v173, %v172
    %v188 = vpack.c.b16 %v175, %v174
    %v189 = vpack.c.b16 %v177, %v176
    %v190 = vpack.c.b16 %v179, %v178
    %v191 = vpack.c.b16 %v181, %v180
    %v192 = vpack.c.b16 %v183, %v182
    %v193 = vpack.c.b16 %v185, %v184
    %202 = vmatprep.subr.bf16.mxu0 0
    %203 = vmatpush1.bf16.msra.mxu0 %v193
    %204 = vmatprep.subr.bf16.mxu0 0
    %205 = vmatpush1.bf16.msra.mxu0 %v192
    %206 = vmatprep.subr.bf16.mxu0 0
    %207 = vmatpush1.bf16.msra.mxu0 %v191
    %208 = vmatprep.subr.bf16.mxu0 0
    %209 = vmatpush1.bf16.msra.mxu0 %v190
    %210 = vmatprep.subr.bf16.mxu0 0
    %211 = vmatpush1.bf16.msra.mxu0 %v189
    %212 = vmatprep.subr.bf16.mxu0 0
    %213 = vmatpush1.bf16.msra.mxu0 %v188
    %214 = vmatprep.subr.bf16.mxu0 0
    %215 = vmatpush1.bf16.msra.mxu0 %v187
    %216 = vmatprep.subr.bf16.mxu0 0
    %217 = vmatpush1.bf16.msra.mxu0 %v186
    %218 = vmatprep.subr.bf16.mxu0 0
    %219 = vmatpush2.bf16.msra.mxu0 0
    %220 = vmatprep.subr.bf16.mxu0 0
    %221 = vmatpush2.bf16.msra.mxu0 0
    %222 = vmatprep.subr.bf16.mxu0 0
    %223 = vmatpush2.bf16.msra.mxu0 0
    %224 = vmatprep.subr.bf16.mxu0 0
    %225 = vmatpush2.bf16.msra.mxu0 0
    %226 = vmatprep.subr.bf16.mxu0 0
    %227 = vmatpush2.bf16.msra.mxu0 0
    %228 = vmatprep.subr.bf16.mxu0 0
    %229 = vmatpush2.bf16.msra.mxu0 0
    %230 = vmatprep.subr.bf16.mxu0 0
    %231 = vmatpush2.bf16.msra.mxu0 0
    %232 = vmatprep.subr.bf16.mxu0 0
    %233 = vmatpush2.bf16.msra.mxu0 0
    %234 = vmatprep.mubr.bf16.mxu0 0
    %235 = vmatmul.mubr.bf16.gmra.mxu0 %v130
    %v236 = vpop.f32.mrf.mxu0
    %v237 = vadd.f32 %v152, %v236
    %v238 = vpop.f32.mrf.mxu0
    %v239 = vpop.f32.mrf.mxu0
    %v240 = vpop.f32.mrf.mxu0
    %241 = vdwg.mxu0
    %v242 = vlaneseq
    %v243 = vand.u32 %v242, 127
    %vm244 = vcmp.lt.s32.totalorder %v243, 10
    %vm245 = vcmp.ge.s32.totalorder %v243, 10
    %vm246 = vcmp.lt.s32.totalorder %v243, 20
    %vm247 = vmand %vm245, %vm246
    %vm248 = vcmp.eq.s32.totalorder %v243, 20
    %v249 = vsel %vm247, %v237, -1e+30
    %250 = vmax.xlane.f32.xlu0 %v249
    %v251 = vpop.xlane.xlu0 %250
    %v252 = vsub.f32 %v249, %v251
    %v253 = vmul.f32 %v252, 1.442695
    %v254 = vpow.pop %v253
    %255 = vadd.xlane.f32.xlu0 %v254
    %v256 = vpop.xlane.xlu0 %255
    %v257 = vrcp.pop %v256
    %v258 = vmul.f32 %v254, %v257
    %v259 = vmax.f32 %v258, 1e-08
    %v260 = vmin.f32 %v259, 1.0
    %v261 = vlog2.pop %v260
    %v262 = vmul.f32 %v261, 0.6931472
    %v263 = vmul.f32 %v260, %v262
    %v264 = vsel %vm247, %v263, 0.0
    %265 = vadd.xlane.f32.xlu0 %v264
    %v266 = vpop.xlane.xlu0 %265
    %v267 = vsub.f32 0.0, %v266
    %v268 = vsel %vm248, %v267, %v258
    %v269 = vsel %vm244, %v237, %v268
    %270 = vst [vmem:[#allocation8] sm:$0xff] %v269
    // Predicated region
    $region34: #{tpu_custom_call.1} parent=1 // pred_check
      _
    $region35: #{tpu_custom_call.1} parent=1 // pred_check_branch
      %272 = sbr.rel (0) target = $region37
    $region36: #{tpu_custom_call.1} parent=1 // pred_region
      %s274 = ssub.s32 128, 128
      %275 = vsyncadd [#allocation4], %s274
      %s277 = sshll.u32 [#allocation8], 4
      %s278 = int_to_ptr.vmem [resolvable:$true] %s277
      %280 = dma.vmem_to_hbm [thread:$0]  %s278, 128, %s5, [#allocation4]
    $region37: #{tpu_custom_call.1} parent=1 // pred_fallthru
      _
    // Predicated region
    $region38: #{tpu_custom_call.1} parent=1 // pred_check
      _
    $region39: #{tpu_custom_call.1} parent=1 // pred_check_branch
      %282 = sbr.rel (0) target = $region41
    $region40: #{tpu_custom_call.1} parent=1 // pred_region
      %283 = dma.done [#allocation4], 128
    $region41: #{tpu_custom_call.1} parent=1 // pred_fallthru
      _
    %284 = vsyncpa [#allocation3], 1
    %285 = vsyncpa [#allocation6], 1
    %286 = vsyncpa [#allocation4], 1

</llo_original>
